<compile_context>
chip_gen: v6e
topology: v6e:2x2x1
jax: 0.10.0
libtpu: 0.0.40
codegen_flags: <defaults>
</compile_context>

<pallas_src>
import functools
import math

import numpy as np
import jax
import jax.numpy as jnp
from jax.experimental import pallas as pl
from jax.experimental.pallas import tpu as pltpu


# ----------------------------------------------------------------------------
# Global knobs
# ----------------------------------------------------------------------------

MXU_DTYPE = jnp.bfloat16          # matmul operand dtype (f32 accumulation)
ACT_DTYPE = jnp.bfloat16          # activation storage dtype (kernel outputs)
WEIGHT_DTYPE = jnp.bfloat16       # storage dtype of projection weights


def _detect_generation():
    """v5e/v6e: bigger tiles + 64 MiB scoped VMEM; v7x/unknown: conservative."""
    try:
        kind = jax.devices()[0].device_kind.lower()
    except Exception:
        kind = ""
    if ("v5" in kind) or ("v6" in kind):
        return 512, 256, 1024, 64 * 1024 * 1024
    return 256, 256, 512, 32 * 1024 * 1024


TM, TN, TK, VMEM_LIMIT = _detect_generation()


def _round_up(v, m):
    return (v + m - 1) // m * m


def _pad2(a, rows, cols):
    r, c = a.shape
    if r == rows and c == cols:
        return a
    return jnp.pad(a, ((0, rows - r), (0, cols - c)))


def _activate(y, activation):
    if activation == "relu":
        return jnp.maximum(y, 0.0)
    if activation == "quick_gelu":
        return y * jax.nn.sigmoid(1.702 * y)
    return y


# ----------------------------------------------------------------------------
# Pallas kernels
# ----------------------------------------------------------------------------

def _mm_kernel(*refs, activation, has_residual):
    """Tiled matmul with K accumulation; bias/activation/residual epilogue."""
    if has_residual:
        x_ref, w_ref, b_ref, r_ref, o_ref, acc_ref = refs
    else:
        x_ref, w_ref, b_ref, o_ref, acc_ref = refs
        r_ref = None
    k = pl.program_id(2)

    @pl.when(k == 0)
    def _init():
        acc_ref[...] = jnp.zeros_like(acc_ref)

    acc_ref[...] += jnp.dot(x_ref[...].astype(MXU_DTYPE),
                            w_ref[...].astype(MXU_DTYPE),
                            preferred_element_type=jnp.float32)

    @pl.when(k == pl.num_programs(2) - 1)
    def _finalize():
        y = acc_ref[...] + b_ref[...].astype(jnp.float32)
        y = _activate(y, activation)
        if r_ref is not None:
            y = y + r_ref[...].astype(jnp.float32)
        o_ref[...] = y.astype(o_ref.dtype)


def _mm_ln_kernel(x_ref, w_ref, b_ref, r_ref, g_ref, be_ref, o_ref, acc_ref,
                  *, eps):
    """Tiled matmul (K accumulation) with residual + post-LayerNorm epilogue.

    The output block spans the full (unpadded) N so the LN statistics are
    exact.  Used for the decoder's post-norm layernorm(linear(...)) pairs.
    """
    k = pl.program_id(1)

    @pl.when(k == 0)
    def _init():
        acc_ref[...] = jnp.zeros_like(acc_ref)

    acc_ref[...] += jnp.dot(x_ref[...].astype(MXU_DTYPE),
                            w_ref[...].astype(MXU_DTYPE),
                            preferred_element_type=jnp.float32)

    @pl.when(k == pl.num_programs(1) - 1)
    def _finalize():
        y = acc_ref[...] + b_ref[...].astype(jnp.float32)
        y = y + r_ref[...].astype(jnp.float32)
        mean = jnp.mean(y, axis=-1, keepdims=True)
        var = jnp.mean(jnp.square(y - mean), axis=-1, keepdims=True)
        yn = (y - mean) * jax.lax.rsqrt(var + eps)
        yn = yn * g_ref[...].astype(jnp.float32) + be_ref[...].astype(jnp.float32)
        o_ref[...] = yn.astype(o_ref.dtype)


def _ln_mm_kernel(x_ref, g_ref, be_ref, w_ref, b_ref, o_ref, xn_ref, *,
                  activation, eps):
    """Pre-LayerNorm (full-K row stats, f32) fused into a matmul.

    LN + the f32->bf16 cast are computed only on the first column tile
    (j == 0) and cached in a VMEM scratch, then reused for the remaining
    column tiles of the same row block (j is the innermost grid axis).
    """
    j = pl.program_id(1)

    @pl.when(j == 0)
    def _ln():
        x = x_ref[...].astype(jnp.float32)
        mean = jnp.mean(x, axis=-1, keepdims=True)
        var = jnp.mean(jnp.square(x - mean), axis=-1, keepdims=True)
        xn = (x - mean) * jax.lax.rsqrt(var + eps)
        xn = xn * g_ref[...].astype(jnp.float32) + be_ref[...].astype(jnp.float32)
        xn_ref[...] = xn.astype(MXU_DTYPE)

    y = jnp.dot(xn_ref[...], w_ref[...].astype(MXU_DTYPE),
                preferred_element_type=jnp.float32)
    y = y + b_ref[...].astype(jnp.float32)
    o_ref[...] = _activate(y, activation).astype(o_ref.dtype)


def _layernorm_kernel(x_ref, g_ref, b_ref, o_ref, *, eps):
    x = x_ref[...].astype(jnp.float32)
    mean = jnp.mean(x, axis=-1, keepdims=True)
    var = jnp.mean(jnp.square(x - mean), axis=-1, keepdims=True)
    y = (x - mean) * jax.lax.rsqrt(var + eps)
    o_ref[...] = (y * g_ref[...] + b_ref[...]).astype(o_ref.dtype)


def _mha_kernel(*refs, nhead, scale, causal, has_kmask):
    """Multi-head attention on (tq, D) query tiles, keys/values full-length.

    bf16 MXU operands, f32 softmax.  Each head uses an exact Dh-wide QK^T and
    a Dh-wide PV matmul; the per-head result is written straight into the
    matching lane range of the output ref (no full-width masked PV, no
    concatenation).  The additive bias (causal / key padding) is rebuilt
    in-kernel from iota + a (1, Sk) key-mask vector.
    """
    if has_kmask:
        q_ref, k_ref, v_ref, m_ref, o_ref = refs
    else:
        q_ref, k_ref, v_ref, o_ref = refs
        m_ref = None

    q = q_ref[0]                               # (tq, D) bf16
    k = k_ref[0].astype(MXU_DTYPE)             # (Sk, D)
    v = v_ref[0].astype(MXU_DTYPE)             # (Sk, D)
    tq, D = q.shape
    Sk = k.shape[0]
    Dh = D // nhead

    # Fold the softmax scale into q once (single Sq x D multiply).
    q = (q.astype(jnp.float32) * scale).astype(MXU_DTYPE)

    bias = None
    if has_kmask:
        km = m_ref[0]                                      # (1, Sk) f32
        bias = jnp.where(km > 0.5, 0.0, -1e9)              # key padding
    if causal:
        q0 = pl.program_id(1) * tq                         # absolute query row
        qi = jax.lax.broadcasted_iota(jnp.int32, (tq, Sk), 0) + q0
        ki = jax.lax.broadcasted_iota(jnp.int32, (tq, Sk), 1)
        c = jnp.where(ki <= qi, 0.0, -1e9)
        bias = c if bias is None else bias + c

    dn = (((1,), (1,)), ((), ()))                          # contract last dims
    for h in range(nhead):
        lo = h * Dh
        qh = q[:, lo:lo + Dh]
        kh = k[:, lo:lo + Dh]
        vh = v[:, lo:lo + Dh]
        s = jax.lax.dot_general(qh, kh, dn,
                                preferred_element_type=jnp.float32)
        if bias is not None:
            s = s + bias
        s = s - jnp.max(s, axis=-1, keepdims=True)
        p = jnp.exp(s)
        p = p * pl.reciprocal(jnp.sum(p, axis=-1, keepdims=True), approx=True)
        oh = jnp.dot(p.astype(MXU_DTYPE), vh,
                     preferred_element_type=jnp.float32)   # (tq, Dh)
        o_ref[0, :, lo:lo + Dh] = oh.astype(o_ref.dtype)


# ----------------------------------------------------------------------------
# Kernel wrappers
# ----------------------------------------------------------------------------

def linear(x, w, b, activation="none", residual=None):
    """y = act(x @ w + b) [+ residual].  Tiled, bf16 MXU, f32 accumulate."""
    *lead, K = x.shape
    M = int(np.prod(lead)) if lead else 1
    N = w.shape[1]
    x2 = x.reshape(M, K)
    tm = min(TM, _round_up(M, 8))
    tn = min(TN, _round_up(N, 128))
    tk = min(TK, _round_up(K, 128))
    Mp, Np, Kp = _round_up(M, tm), _round_up(N, tn), _round_up(K, tk)

    xp = _pad2(x2, Mp, Kp)
    wp = _pad2(w, Kp, Np)
    bp = _pad2(b.reshape(1, N).astype(jnp.float32), 1, Np)
    args = [xp, wp, bp]
    in_specs = [
        pl.BlockSpec((tm, tk), lambda i, j, k: (i, k)),
        pl.BlockSpec((tk, tn), lambda i, j, k: (k, j)),
        pl.BlockSpec((1, tn), lambda i, j, k: (0, j)),
    ]
    if residual is not None:
        rp = _pad2(residual.reshape(M, N).astype(ACT_DTYPE), Mp, Np)
        args.append(rp)
        in_specs.append(pl.BlockSpec((tm, tn), lambda i, j, k: (i, j)))

    out = pl.pallas_call(
        functools.partial(_mm_kernel, activation=activation,
                          has_residual=residual is not None),
        out_shape=jax.ShapeDtypeStruct((Mp, Np), ACT_DTYPE),
        grid=(Mp // tm, Np // tn, Kp // tk),
        in_specs=in_specs,
        out_specs=pl.BlockSpec((tm, tn), lambda i, j, k: (i, j)),
        scratch_shapes=[pltpu.VMEM((tm, tn), jnp.float32)],
        compiler_params=pltpu.CompilerParams(
            dimension_semantics=("parallel", "parallel", "arbitrary"),
            vmem_limit_bytes=VMEM_LIMIT),
    )(*args)
    return out[:M, :N].reshape(*lead, N)


def linear_ln(x, w, b, residual, g, beta, eps=1e-5):
    """Fused (x @ w + b + residual) followed by LayerNorm over the full N."""
    *lead, K = x.shape
    M = int(np.prod(lead)) if lead else 1
    N = w.shape[1]
    x2 = x.reshape(M, K)
    tm = min(TM, _round_up(M, 8))
    tk = min(TK, _round_up(K, 128))
    Mp, Kp = _round_up(M, tm), _round_up(K, tk)

    xp = _pad2(x2, Mp, Kp)
    wp = _pad2(w, Kp, N)                      # N NOT padded (true LN width)
    rp = _pad2(residual.reshape(M, N).astype(ACT_DTYPE), Mp, N)
    bp = b.reshape(1, N).astype(jnp.float32)
    gp = g.reshape(1, N).astype(jnp.float32)
    bep = beta.reshape(1, N).astype(jnp.float32)

    out = pl.pallas_call(
        functools.partial(_mm_ln_kernel, eps=eps),
        out_shape=jax.ShapeDtypeStruct((Mp, N), ACT_DTYPE),
        grid=(Mp // tm, Kp // tk),
        in_specs=[
            pl.BlockSpec((tm, tk), lambda i, k: (i, k)),
            pl.BlockSpec((tk, N), lambda i, k: (k, 0)),
            pl.BlockSpec((1, N), lambda i, k: (0, 0)),
            pl.BlockSpec((tm, N), lambda i, k: (i, 0)),
            pl.BlockSpec((1, N), lambda i, k: (0, 0)),
            pl.BlockSpec((1, N), lambda i, k: (0, 0)),
        ],
        out_specs=pl.BlockSpec((tm, N), lambda i, k: (i, 0)),
        scratch_shapes=[pltpu.VMEM((tm, N), jnp.float32)],
        compiler_params=pltpu.CompilerParams(
            dimension_semantics=("parallel", "arbitrary"),
            vmem_limit_bytes=VMEM_LIMIT),
    )(xp, wp, bp, rp, gp, bep)
    return out[:M, :N].reshape(*lead, N)


def ln_linear(x, g, beta, w, b, activation="none", eps=1e-5):
    """Fused pre-LayerNorm + matmul (full-K block so LN stats are exact)."""
    *lead, K = x.shape
    M = int(np.prod(lead)) if lead else 1
    N = w.shape[1]
    x2 = x.reshape(M, K)
    tm = min(TM, _round_up(M, 8))
    tn = min(TN, _round_up(N, 128))
    Mp, Np = _round_up(M, tm), _round_up(N, tn)

    xp = _pad2(x2, Mp, K)                  # K is NOT padded (true LN width)
    wp = _pad2(w, K, Np)
    bp = _pad2(b.reshape(1, N).astype(jnp.float32), 1, Np)

    out = pl.pallas_call(
        functools.partial(_ln_mm_kernel, activation=activation, eps=eps),
        out_shape=jax.ShapeDtypeStruct((Mp, Np), ACT_DTYPE),
        grid=(Mp // tm, Np // tn),
        in_specs=[
            pl.BlockSpec((tm, K), lambda i, j: (i, 0)),
            pl.BlockSpec((1, K), lambda i, j: (0, 0)),
            pl.BlockSpec((1, K), lambda i, j: (0, 0)),
            pl.BlockSpec((K, tn), lambda i, j: (0, j)),
            pl.BlockSpec((1, tn), lambda i, j: (0, j)),
        ],
        out_specs=pl.BlockSpec((tm, tn), lambda i, j: (i, j)),
        scratch_shapes=[pltpu.VMEM((tm, K), MXU_DTYPE)],
        compiler_params=pltpu.CompilerParams(
            dimension_semantics=("parallel", "arbitrary"),
            vmem_limit_bytes=VMEM_LIMIT),
    )(xp, g.reshape(1, K).astype(jnp.float32),
      beta.reshape(1, K).astype(jnp.float32), wp, bp)
    return out[:M, :N].reshape(*lead, N)


def layernorm(x, g, b, eps=1e-5):
    *lead, D = x.shape
    M = int(np.prod(lead)) if lead else 1
    x2 = x.reshape(M, D)
    tm = min(512, _round_up(M, 8))
    Mp = _round_up(M, tm)
    xp = _pad2(x2, Mp, D)
    out = pl.pallas_call(
        functools.partial(_layernorm_kernel, eps=eps),
        out_shape=jax.ShapeDtypeStruct((Mp, D), ACT_DTYPE),
        grid=(Mp // tm,),
        in_specs=[
            pl.BlockSpec((tm, D), lambda i: (i, 0)),
            pl.BlockSpec((1, D), lambda i: (0, 0)),
            pl.BlockSpec((1, D), lambda i: (0, 0)),
        ],
        out_specs=pl.BlockSpec((tm, D), lambda i: (i, 0)),
        compiler_params=pltpu.CompilerParams(
            dimension_semantics=("parallel",), vmem_limit_bytes=VMEM_LIMIT),
    )(xp, g.reshape(1, D).astype(jnp.float32),
      b.reshape(1, D).astype(jnp.float32))
    return out[:M, :D].reshape(*lead, D)


def mha(q, k, v, nhead, kv_mask=None, causal=False, q_block=256):
    """q/k/v: (B, S, D) lane-dense; grid over (batch, Sq tiles)."""
    B, Sq, D = q.shape
    Sk = k.shape[1]
    scale = 1.0 / math.sqrt(D // nhead)

    tq = min(q_block, _round_up(Sq, 8))
    Sqp = _round_up(Sq, tq)
    qp = jnp.pad(q, ((0, 0), (0, Sqp - Sq), (0, 0))) if Sqp != Sq else q

    in_specs = [
        pl.BlockSpec((1, tq, D), lambda b, i: (b, i, 0)),
        pl.BlockSpec((1, Sk, D), lambda b, i: (b, 0, 0)),
        pl.BlockSpec((1, Sk, D), lambda b, i: (b, 0, 0)),
    ]
    args = [qp.astype(ACT_DTYPE), k.astype(ACT_DTYPE), v.astype(ACT_DTYPE)]
    if kv_mask is not None:
        args.append(kv_mask.reshape(B, 1, Sk).astype(jnp.float32))
        in_specs.append(pl.BlockSpec((1, 1, Sk), lambda b, i: (b, 0, 0)))

    out = pl.pallas_call(
        functools.partial(_mha_kernel, nhead=nhead, scale=scale,
                          causal=causal, has_kmask=kv_mask is not None),
        out_shape=jax.ShapeDtypeStruct((B, Sqp, D), ACT_DTYPE),
        grid=(B, Sqp // tq),
        in_specs=in_specs,
        out_specs=pl.BlockSpec((1, tq, D), lambda b, i: (b, i, 0)),
        compiler_params=pltpu.CompilerParams(
            dimension_semantics=("parallel", "parallel"),
            vmem_limit_bytes=VMEM_LIMIT),
    )(*args)
    return out[:, :Sq, :]


# ----------------------------------------------------------------------------
# Model building blocks (glue around the Pallas kernels)
# ----------------------------------------------------------------------------

def clip_encoder_layer(x, p, nhead, kv_mask=None, causal=False):
    """Pre-LN CLIP block: fused LN+QKV, fused LN+fc1, residuals fused into
    out-proj / fc2 epilogues."""
    D = x.shape[-1]
    qkv = ln_linear(x, p["ln1_g"], p["ln1_b"], p["wqkv"], p["bqkv"])
    q, k, v = qkv[..., :D], qkv[..., D:2 * D], qkv[..., 2 * D:]
    a = mha(q, k, v, nhead, kv_mask=kv_mask, causal=causal)
    x = linear(a, p["wo"], p["bo"], residual=x)
    h = ln_linear(x, p["ln2_g"], p["ln2_b"], p["fc1_w"], p["fc1_b"],
                  activation="quick_gelu")
    x = linear(h, p["fc2_w"], p["fc2_b"], residual=x)
    return x


def clip_text_model(input_ids, attention_mask, p):
    B, L = input_ids.shape
    x = (p["tok_emb"][input_ids] + p["pos_emb"][None, :L, :]).astype(ACT_DTYPE)
    kv_mask = attention_mask.astype(jnp.float32)       # (B, L), 1 = valid
    for lp in p["layers"]:
        x = clip_encoder_layer(x, lp, p["nhead"], kv_mask=kv_mask, causal=True)
    x = layernorm(x, p["final_ln_g"], p["final_ln_b"])
    eot = jnp.argmax(input_ids, axis=-1)                # CLIP pools at EOT token
    pooled = x[jnp.arange(B), eot]
    return x, pooled


def clip_vision_model(pixel_values, p):
    # Patchify: NCHW -> NHWC (channel innermost / lane-contiguous) -> patches.
    BF, C, H, W = pixel_values.shape
    ph = p["patch"]
    nH, nW = H // ph, W // ph
    x = pixel_values.transpose(0, 2, 3, 1)                       # NHWC
    x = x.reshape(BF, nH, ph, nW, ph, C).transpose(0, 1, 3, 2, 4, 5)
    x = x.reshape(BF, nH * nW, ph * ph * C)
    x = linear(x, p["patch_w"], p["patch_b"])                    # patch embed
    d = x.shape[-1]
    cls = jnp.broadcast_to(p["cls_emb"][None, None, :], (BF, 1, d))
    x = jnp.concatenate([cls.astype(ACT_DTYPE), x], axis=1)
    x = x + p["pos_emb"][None, :, :].astype(ACT_DTYPE)
    x = layernorm(x, p["pre_ln_g"], p["pre_ln_b"])
    for lp in p["layers"]:
        x = clip_encoder_layer(x, lp, p["nhead"])                # no mask
    pooled = x[:, 0, :]
    # post-LN fused into the visual projection (no bias in CLIP)
    image_embeds = ln_linear(pooled, p["post_ln_g"], p["post_ln_b"],
                             p["proj_w"], p["proj_b"])
    return image_embeds


def transformer_decoder_layer(tgt, memory, p, key_mask, nhead):
    """PyTorch nn.TransformerDecoderLayer, batch_first, post-norm, ReLU, eval.
    Each post-norm layernorm(linear(...)+residual) pair is a single fused
    `linear_ln` kernel."""
    D = tgt.shape[-1]
    # self-attention (key padding mask only)
    qkv = linear(tgt, p["sa_wqkv"], p["sa_bqkv"])
    q, k, v = qkv[..., :D], qkv[..., D:2 * D], qkv[..., 2 * D:]
    a = mha(q, k, v, nhead, kv_mask=key_mask, causal=False)
    x = linear_ln(a, p["sa_wo"], p["sa_bo"], tgt, p["ln1_g"], p["ln1_b"])
    # cross-attention (no mask)
    qc = linear(x, p["ca_wq"], p["ca_bq"])
    kv = linear(memory, p["ca_wkv"], p["ca_bkv"])
    k2, v2 = kv[..., :D], kv[..., D:]
    a = mha(qc, k2, v2, nhead)
    x = linear_ln(a, p["ca_wo"], p["ca_bo"], x, p["ln2_g"], p["ln2_b"])
    # feed-forward
    h = linear(x, p["ff1_w"], p["ff1_b"], activation="relu")
    x = linear_ln(h, p["ff2_w"], p["ff2_b"], x, p["ln3_g"], p["ln3_b"])
    return x


def clip_for_seq_classification(params, txt_inputs, vis_inputs, video_start_end,
                                repeat_counts=None):
    input_ids = txt_inputs["input_ids"]
    attention_mask = txt_inputs["attention_mask"]
    pixel_values = vis_inputs["pixel_values"]

    txt_last_hidden, txt_pooled = clip_text_model(input_ids, attention_mask,
                                                  params["txt"])
    image_embeds = clip_vision_model(pixel_values, params["vis"])   # (BF, proj)

    B, e_t = txt_pooled.shape
    decoded_tokens = jnp.zeros((B, 1, e_t), dtype=txt_last_hidden.dtype)
    txt_attn_mask = jnp.concatenate(
        [jnp.ones((B, 1), dtype=attention_mask.dtype), attention_mask], axis=1)

    if repeat_counts is None:
        sample_vis_outputs = jnp.stack(
            [image_embeds[s:e]
             for s, e in zip(video_start_end[:-1], video_start_end[1:])])
    else:
        parts = [jnp.tile(jnp.mean(image_embeds[s:e], axis=0, keepdims=True),
                          (rc, 1))
                 for s, e, rc in zip(video_start_end[:-1], video_start_end[1:],
                                     repeat_counts)]
        sample_vis_outputs = jnp.concatenate(parts, axis=0)

    txt_attn_in = jnp.concatenate([decoded_tokens, txt_last_hidden], axis=1)
    attn_out = transformer_decoder_layer(
        txt_attn_in, sample_vis_outputs, params["dec"],
        key_mask=txt_attn_mask.astype(jnp.float32), nhead=8)
    cls_tok = attn_out[:, 0, :]                # slice CLS row BEFORE the matmul
    # Classifier head: M=B, N=num_labels — far below one tile; plain jnp.dot
    # beats kernel launch + lane padding overhead on every generation.
    logits = (jnp.dot(cls_tok.astype(jnp.float32),
                      params["cls_w"].astype(jnp.float32))
              + params["cls_b"])
    return logits


# ----------------------------------------------------------------------------
# Deterministic parameter initialization (synthetic weights, not a checkpoint)
# ----------------------------------------------------------------------------

def _w(key, shape, dtype=WEIGHT_DTYPE):
    return (jax.random.normal(key, shape, dtype=jnp.float32) * 0.02).astype(dtype)


def init_encoder_layer(key, d):
    ks = jax.random.split(key, 4)
    return dict(
        ln1_g=jnp.ones((d,), jnp.float32), ln1_b=jnp.zeros((d,), jnp.float32),
        wqkv=_w(ks[0], (d, 3 * d)), bqkv=jnp.zeros((3 * d,), jnp.float32),
        wo=_w(ks[1], (d, d)), bo=jnp.zeros((d,), jnp.float32),
        ln2_g=jnp.ones((d,), jnp.float32), ln2_b=jnp.zeros((d,), jnp.float32),
        fc1_w=_w(ks[2], (d, 4 * d)), fc1_b=jnp.zeros((4 * d,), jnp.float32),
        fc2_w=_w(ks[3], (4 * d, d)), fc2_b=jnp.zeros((d,), jnp.float32),
    )


def init_text_model(key, vocab, max_len, d, n_layers, nhead):
    ks = jax.random.split(key, n_layers + 2)
    return dict(
        nhead=nhead,
        tok_emb=_w(ks[0], (vocab, d), dtype=ACT_DTYPE),
        pos_emb=_w(ks[1], (max_len, d), dtype=ACT_DTYPE),
        layers=[init_encoder_layer(ks[2 + i], d) for i in range(n_layers)],
        final_ln_g=jnp.ones((d,), jnp.float32),
        final_ln_b=jnp.zeros((d,), jnp.float32),
    )


def init_vision_model(key, c, patch, n_patches, d, proj_dim, n_layers, nhead):
    ks = jax.random.split(key, n_layers + 4)
    return dict(
        nhead=nhead, patch=patch,
        patch_w=_w(ks[0], (patch * patch * c, d)),
        patch_b=jnp.zeros((d,), jnp.float32),           # CLIP conv has no bias
        cls_emb=_w(ks[1], (d,), dtype=ACT_DTYPE),
        pos_emb=_w(ks[2], (n_patches + 1, d), dtype=ACT_DTYPE),
        pre_ln_g=jnp.ones((d,), jnp.float32), pre_ln_b=jnp.zeros((d,), jnp.float32),
        layers=[init_encoder_layer(ks[3 + i], d) for i in range(n_layers)],
        post_ln_g=jnp.ones((d,), jnp.float32), post_ln_b=jnp.zeros((d,), jnp.float32),
        proj_w=_w(ks[3 + n_layers], (d, proj_dim)),
        proj_b=jnp.zeros((proj_dim,), jnp.float32),     # visual_projection: no bias
    )


def init_decoder_layer(key, d):
    ks = jax.random.split(key, 7)
    return dict(
        sa_wqkv=_w(ks[0], (d, 3 * d)), sa_bqkv=jnp.zeros((3 * d,), jnp.float32),
        sa_wo=_w(ks[1], (d, d)), sa_bo=jnp.zeros((d,), jnp.float32),
        ca_wq=_w(ks[2], (d, d)), ca_bq=jnp.zeros((d,), jnp.float32),
        ca_wkv=_w(ks[3], (d, 2 * d)), ca_bkv=jnp.zeros((2 * d,), jnp.float32),
        ca_wo=_w(ks[4], (d, d)), ca_bo=jnp.zeros((d,), jnp.float32),
        ln1_g=jnp.ones((d,), jnp.float32), ln1_b=jnp.zeros((d,), jnp.float32),
        ln2_g=jnp.ones((d,), jnp.float32), ln2_b=jnp.zeros((d,), jnp.float32),
        ln3_g=jnp.ones((d,), jnp.float32), ln3_b=jnp.zeros((d,), jnp.float32),
        ff1_w=_w(ks[5], (d, 4 * d)), ff1_b=jnp.zeros((4 * d,), jnp.float32),
        ff2_w=_w(ks[6], (4 * d, d)), ff2_b=jnp.zeros((d,), jnp.float32),
    )


# ----------------------------------------------------------------------------
# Main
# ----------------------------------------------------------------------------

if __name__ == "__main__":
    # small synthetic config
    B, Lt, VOCAB = 2, 8, 64
    D_TXT, TXT_LAYERS, TXT_HEADS = 32, 2, 4
    C, IMG, PATCH = 3, 16, 8
    N_PATCHES = (IMG // PATCH) ** 2
    D_VIS, VIS_LAYERS, VIS_HEADS, PROJ = 32, 2, 4, 32   # PROJ == txt_output_size
    FRAMES_PER_VIDEO = 2
    BF = B * FRAMES_PER_VIDEO
    NUM_LABELS = 3

    root = jax.random.PRNGKey(0)
    k_txt, k_vis, k_dec, k_cls, k_ids, k_pix = jax.random.split(root, 6)

    params = dict(
        txt=init_text_model(k_txt, VOCAB, Lt, D_TXT, TXT_LAYERS, TXT_HEADS),
        vis=init_vision_model(k_vis, C, PATCH, N_PATCHES, D_VIS, PROJ,
                              VIS_LAYERS, VIS_HEADS),
        dec=init_decoder_layer(k_dec, D_TXT),
        cls_w=_w(k_cls, (D_TXT, NUM_LABELS)),
        cls_b=jnp.zeros((NUM_LABELS,), jnp.float32),
    )

    input_ids = jax.random.randint(k_ids, (B, Lt), 1, VOCAB, dtype=jnp.int32)
    attention_mask = jnp.array([[1] * Lt,
                                [1] * (Lt - 2) + [0] * 2], dtype=jnp.int32)
    pixel_values = jax.random.normal(k_pix, (BF, C, IMG, IMG), dtype=jnp.float32)

    txt_inputs = dict(input_ids=input_ids, attention_mask=attention_mask)
    vis_inputs = dict(pixel_values=pixel_values)
    video_start_end = [0, 2, 4]          # two videos, 2 frames each

    logits = clip_for_seq_classification(params, txt_inputs, vis_inputs,
                                         video_start_end, repeat_counts=None)
    logits = jax.block_until_ready(logits)
    assert logits.shape == (B, NUM_LABELS)
    assert bool(jnp.all(jnp.isfinite(logits)))
    print("KERNEL_OK")
</pallas_src>

<mosaic_0001>
module attributes {stable_mosaic.version = 11 : i64} {
  func.func @_ln_mm_kernel(%arg0: i32, %arg1: i32, %arg2: memref<16x32xbf16, #tpu.memory_space<vmem>>, %arg3: memref<1x32xf32, #tpu.memory_space<vmem>>, %arg4: memref<1x32xf32, #tpu.memory_space<vmem>>, %arg5: memref<32x128xbf16, #tpu.memory_space<vmem>>, %arg6: memref<1x128xf32, #tpu.memory_space<vmem>>, %arg7: memref<16x128xbf16, #tpu.memory_space<vmem>>, %arg8: memref<16x32xbf16, #tpu.memory_space<vmem>>) attributes {dimension_semantics = [#tpu.dimension_semantics<parallel>, #tpu.dimension_semantics<arbitrary>], iteration_bounds = array<i64: 1, 1>, scalar_prefetch = 0 : i64, scratch_operands = 1 : i64, tpu.core_type = #tpu.core_type<tc>, window_params = [{transform_indices = @transform_0, window_bounds = array<i64: 16, 32>}, {pipeline_mode = #tpu.pipeline_mode<synchronous>, transform_indices = @transform_1, window_bounds = array<i64: 1, 32>}, {pipeline_mode = #tpu.pipeline_mode<synchronous>, transform_indices = @transform_2, window_bounds = array<i64: 1, 32>}, {transform_indices = @transform_3, window_bounds = array<i64: 32, 128>}, {transform_indices = @transform_4, window_bounds = array<i64: 1, 128>}, {transform_indices = @transform_5, window_bounds = array<i64: 16, 128>}]} {
    %c0_i32 = arith.constant 0 : i32
    %0 = arith.cmpi eq, %arg1, %c0_i32 : i32
    %1 = arith.extui %0 : i1 to i32
    %c0_i32_0 = arith.constant 0 : i32
    %2 = arith.cmpi ne, %1, %c0_i32_0 : i32
    scf.if %2 {
      %c0_8 = arith.constant 0 : index
      %c0_9 = arith.constant 0 : index
      %11 = vector.load %arg2[%c0_8, %c0_9] : memref<16x32xbf16, #tpu.memory_space<vmem>>, vector<16x32xbf16>
      %12 = arith.extf %11 : vector<16x32xbf16> to vector<16x32xf32>
      %cst_10 = arith.constant dense<0.000000e+00> : vector<16xf32>
      %13 = vector.multi_reduction <add>, %12, %cst_10 [1] : vector<16x32xf32> to vector<16xf32>
      %14 = vector.shape_cast %13 : vector<16xf32> to vector<16x1xf32>
      %cst_11 = arith.constant 3.200000e+01 : f32
      %15 = vector.broadcast %cst_11 : f32 to vector<16x1xf32>
      %16 = arith.divf %14, %15 : vector<16x1xf32>
      %17 = vector.broadcast %16 : vector<16x1xf32> to vector<16x32xf32>
      %18 = arith.subf %12, %17 : vector<16x32xf32>
      %19 = arith.mulf %18, %18 : vector<16x32xf32>
      %cst_12 = arith.constant dense<0.000000e+00> : vector<16xf32>
      %20 = vector.multi_reduction <add>, %19, %cst_12 [1] : vector<16x32xf32> to vector<16xf32>
      %21 = vector.shape_cast %20 : vector<16xf32> to vector<16x1xf32>
      %cst_13 = arith.constant 3.200000e+01 : f32
      %22 = vector.broadcast %cst_13 : f32 to vector<16x1xf32>
      %23 = arith.divf %21, %22 : vector<16x1xf32>
      %24 = vector.broadcast %16 : vector<16x1xf32> to vector<16x32xf32>
      %25 = arith.subf %12, %24 : vector<16x32xf32>
      %cst_14 = arith.constant 9.99999974E-6 : f32
      %26 = vector.broadcast %cst_14 : f32 to vector<16x1xf32>
      %27 = arith.addf %23, %26 : vector<16x1xf32>
      %28 = math.rsqrt %27 : vector<16x1xf32>
      %29 = vector.broadcast %28 : vector<16x1xf32> to vector<16x32xf32>
      %30 = arith.mulf %25, %29 : vector<16x32xf32>
      %c0_15 = arith.constant 0 : index
      %c0_16 = arith.constant 0 : index
      %31 = vector.load %arg3[%c0_15, %c0_16] : memref<1x32xf32, #tpu.memory_space<vmem>>, vector<1x32xf32>
      %32 = vector.broadcast %31 : vector<1x32xf32> to vector<16x32xf32>
      %33 = arith.mulf %30, %32 : vector<16x32xf32>
      %c0_17 = arith.constant 0 : index
      %c0_18 = arith.constant 0 : index
      %34 = vector.load %arg4[%c0_17, %c0_18] : memref<1x32xf32, #tpu.memory_space<vmem>>, vector<1x32xf32>
      %35 = vector.broadcast %34 : vector<1x32xf32> to vector<16x32xf32>
      %36 = arith.addf %33, %35 : vector<16x32xf32>
      %37 = arith.truncf %36 : vector<16x32xf32> to vector<16x32xbf16>
      %c0_19 = arith.constant 0 : index
      %c0_20 = arith.constant 0 : index
      %38 = vector.load %arg8[%c0_19, %c0_20] : memref<16x32xbf16, #tpu.memory_space<vmem>>, vector<16x32xbf16>
      tpu.vector_store %arg8[%c0_19, %c0_20], %37 {strides = array<i32>} : memref<16x32xbf16, #tpu.memory_space<vmem>>, vector<16x32xbf16>,
    } else {
    }
    %c0 = arith.constant 0 : index
    %c0_1 = arith.constant 0 : index
    %3 = vector.load %arg8[%c0, %c0_1] : memref<16x32xbf16, #tpu.memory_space<vmem>>, vector<16x32xbf16>
    %c0_2 = arith.constant 0 : index
    %c0_3 = arith.constant 0 : index
    %4 = vector.load %arg5[%c0_2, %c0_3] : memref<32x128xbf16, #tpu.memory_space<vmem>>, vector<32x128xbf16>
    %cst = arith.constant dense<0.000000e+00> : vector<16x128xf32>
    %5 = tpu.matmul %3, %4, %cst {dimension_numbers = #tpu.dot_dimension_numbers<[1], [0], [0], [1], [0, 0, 1, 1], [], []>} : vector<16x32xbf16>, vector<32x128xbf16>, vector<16x128xf32> -> vector<16x128xf32>
    %c0_4 = arith.constant 0 : index
    %c0_5 = arith.constant 0 : index
    %6 = vector.load %arg6[%c0_4, %c0_5] : memref<1x128xf32, #tpu.memory_space<vmem>>, vector<1x128xf32>
    %7 = vector.broadcast %6 : vector<1x128xf32> to vector<16x128xf32>
    %8 = arith.addf %5, %7 : vector<16x128xf32>
    %9 = arith.truncf %8 : vector<16x128xf32> to vector<16x128xbf16>
    %c0_6 = arith.constant 0 : index
    %c0_7 = arith.constant 0 : index
    %10 = vector.load %arg7[%c0_6, %c0_7] : memref<16x128xbf16, #tpu.memory_space<vmem>>, vector<16x128xbf16>
    tpu.vector_store %arg7[%c0_6, %c0_7], %9 {strides = array<i32>} : memref<16x128xbf16, #tpu.memory_space<vmem>>, vector<16x128xbf16>,
    return
  }
  func.func @transform_0(%arg0: i32, %arg1: i32) -> (i32, i32) {
    %c0_i32 = arith.constant 0 : i32
    %c0_i32_0 = arith.constant 0 : i32
    return %arg0, %c0_i32 : i32, i32
  }
  func.func @transform_1(%arg0: i32, %arg1: i32) -> (i32, i32) {
    %c0_i32 = arith.constant 0 : i32
    %c0_i32_0 = arith.constant 0 : i32
    %c0_i32_1 = arith.constant 0 : i32
    return %c0_i32, %c0_i32_0 : i32, i32
  }
  func.func @transform_2(%arg0: i32, %arg1: i32) -> (i32, i32) {
    %c0_i32 = arith.constant 0 : i32
    %c0_i32_0 = arith.constant 0 : i32
    %c0_i32_1 = arith.constant 0 : i32
    return %c0_i32, %c0_i32_0 : i32, i32
  }
  func.func @transform_3(%arg0: i32, %arg1: i32) -> (i32, i32) {
    %c0_i32 = arith.constant 0 : i32
    %c0_i32_0 = arith.constant 0 : i32
    return %c0_i32, %arg1 : i32, i32
  }
  func.func @transform_4(%arg0: i32, %arg1: i32) -> (i32, i32) {
    %c0_i32 = arith.constant 0 : i32
    %c0_i32_0 = arith.constant 0 : i32
    return %c0_i32, %arg1 : i32, i32
  }
  func.func @transform_5(%arg0: i32, %arg1: i32) -> (i32, i32) {
    %c0_i32 = arith.constant 0 : i32
    return %arg0, %arg1 : i32, i32
  }
}

</mosaic_0001>

<llo_original>
// kernel: tpu_custom_call.1
$region0: #{tpu_custom_call.1}
  #allocation0 [shape = 'u32[]', space=smem, size = 0x4, offset = 0x4, fixed_abs, tag = 'smem constant byte address 0x4 - core index']
  #allocation1 [shape = 'u32[144,128]{1,0:T(1,128)}', space=vmem, size = 0x12000, scoped, tag = 'internal scratch']
  #allocation2 [shape = 'bf16[16,32]{1,0:T(8,128)(2,1)}', space=vmem, size = 0x1000, scoped, tag = 'scratch operand']
  %s0 = inlined_call_operand.hbm [shape: bf16[16,32], index: 0, kind: input, shape index: {}]
  %s1 = inlined_call_operand.vmem [shape: f32[1,32], index: 1, kind: input, shape index: {}]
  %s2 = inlined_call_operand.vmem [shape: f32[1,32], index: 2, kind: input, shape index: {}]
  %s3 = inlined_call_operand.hbm [shape: bf16[32,128], index: 3, kind: input, shape index: {}]
  %s4 = inlined_call_operand.vmem [shape: f32[1,128], index: 4, kind: input, shape index: {}]
  %s5 = inlined_call_operand.hbm [shape: bf16[16,128], index: 5, kind: output, shape index: {}]
  %s6 = sld [smem:[#allocation0]]
  $region42: #{tpu_custom_call.1} parent=0
    _
  %s8 = ssub.s32 1, %s6
  %s9 = scalar_select 0, %s8, %s6
  $region1: #{tpu_custom_call.1} parent=0
    #allocation3 [shape = 'u8[4096]{0}', space=vmem, size = 0x1000, scoped, tag = 'input window, operand 0, single buffered']
    #allocation4 [shape = 's32[1]{0}', space=sflag, size = 0x4, scoped, tag = 'scoped memory for tpu_custom_call.1']
    #allocation5 [shape = 's32[1]{0}', space=sflag, size = 0x4, scoped, tag = 'scoped memory for tpu_custom_call.1']
    #allocation6 [shape = 'u8[8192]{0}', space=vmem, size = 0x2000, scoped, tag = 'input window, operand 3, single buffered']
    #allocation7 [shape = 's32[1]{0}', space=sflag, size = 0x4, scoped, tag = 'scoped memory for tpu_custom_call.1']
    #allocation8 [shape = 'u8[4096]{0}', space=vmem, size = 0x1000, scoped, tag = 'output window, operand 0, single buffered']
    %10 = vsyncpa [#allocation4], 0
    %11 = vsyncpa [#allocation7], 0
    %12 = vsyncpa [#allocation5], 0
    // Predicated region
    $region2: #{tpu_custom_call.1} parent=1 // pred_check
      _
    $region3: #{tpu_custom_call.1} parent=1 // pred_check_branch
      %14 = sbr.rel (0) target = $region5
    $region4: #{tpu_custom_call.1} parent=1 // pred_region
      %s16 = ssub.s32 128, 128
      %17 = vsyncadd [#allocation4], %s16
      %s18 = sshll.u32 [#allocation3], 4
      %s19 = int_to_ptr.vmem [resolvable:$true] %s18
      %24 = dma.hbm_to_vmem [thread:$0]  %s0, 128, %s19, [#allocation4], 64, 64, 4
    $region5: #{tpu_custom_call.1} parent=1 // pred_fallthru
      _
    // Predicated region
    $region6: #{tpu_custom_call.1} parent=1 // pred_check
      _
    $region7: #{tpu_custom_call.1} parent=1 // pred_check_branch
      %26 = sbr.rel (0) target = $region9
    $region8: #{tpu_custom_call.1} parent=1 // pred_region
      _
    $region9: #{tpu_custom_call.1} parent=1 // pred_fallthru
      _
    // Predicated region
    $region10: #{tpu_custom_call.1} parent=1 // pred_check
      _
    $region11: #{tpu_custom_call.1} parent=1 // pred_check_branch
      %28 = sbr.rel (0) target = $region13
    $region12: #{tpu_custom_call.1} parent=1 // pred_region
      _
    $region13: #{tpu_custom_call.1} parent=1 // pred_fallthru
      _
    // Predicated region
    $region14: #{tpu_custom_call.1} parent=1 // pred_check
      _
    $region15: #{tpu_custom_call.1} parent=1 // pred_check_branch
      %30 = sbr.rel (0) target = $region17
    $region16: #{tpu_custom_call.1} parent=1 // pred_region
      %s32 = ssub.s32 256, 256
      %33 = vsyncadd [#allocation7], %s32
      %s34 = sshll.u32 [#allocation6], 4
      %s35 = int_to_ptr.vmem [resolvable:$true] %s34
      %40 = dma.hbm_to_vmem [thread:$0]  %s3, 256, %s35, [#allocation7], 64, 64, 4
    $region17: #{tpu_custom_call.1} parent=1 // pred_fallthru
      _
    // Predicated region
    $region18: #{tpu_custom_call.1} parent=1 // pred_check
      _
    $region19: #{tpu_custom_call.1} parent=1 // pred_check_branch
      %42 = sbr.rel (0) target = $region21
    $region20: #{tpu_custom_call.1} parent=1 // pred_region
      _
    $region21: #{tpu_custom_call.1} parent=1 // pred_fallthru
      _
    // Predicated region
    $region22: #{tpu_custom_call.1} parent=1 // pred_check
      _
    $region23: #{tpu_custom_call.1} parent=1 // pred_check_branch
      %44 = sbr.rel (0) target = $region25
    $region24: #{tpu_custom_call.1} parent=1 // pred_region
      %45 = dma.done [#allocation4], 128
    $region25: #{tpu_custom_call.1} parent=1 // pred_fallthru
      _
    // Predicated region
    $region26: #{tpu_custom_call.1} parent=1 // pred_check
      _
    $region27: #{tpu_custom_call.1} parent=1 // pred_check_branch
      %47 = sbr.rel (0) target = $region29
    $region28: #{tpu_custom_call.1} parent=1 // pred_region
      %48 = dma.done [#allocation7], 256
    $region29: #{tpu_custom_call.1} parent=1 // pred_fallthru
      _
    %p50 = scmp.eq.s32.totalorder 0, 0
    // Predicated region
    $region30: #{tpu_custom_call.1} parent=1 // pred_check
      %p51 = pneg %p50
    $region31: #{tpu_custom_call.1} parent=1 // pred_check_branch
      %53 = sbr.rel (%p51) target = $region33
    $region32: #{tpu_custom_call.1} parent=1 // pred_region
      %v54 = vld [vmem:[#allocation3] sm:$0xf]
      %v55 = vld [vmem:[#allocation3 + $0x4] sm:$0xf]
      %v56 = vunpack.c.l.bf16 %v54
      %v57 = vunpack.c.l.bf16 %v55
      %vm58 = vcmask 261120
      %v59 = vsel %vm58, %v56, 0.0
      %60 = vadd.xlane.f32.xlu0 %v59
      %v61 = vpop.xlane.xlu0 %60
      %v62 = vsel %vm58, %v57, 0.0
      %63 = vadd.xlane.f32.xlu0 %v62
      %v64 = vpop.xlane.xlu0 %63
      %v65 = vrcp.pop 32.0
      %v66 = vmul.f32 %v61, %v65
      %v67 = vmul.f32 %v64, %v65
      %v68 = vsub.f32 %v56, %v66
      %v69 = vsub.f32 %v57, %v67
      %v70 = vmul.f32 %v68, %v68
      %v71 = vmul.f32 %v69, %v69
      %v72 = vsel %vm58, %v70, 0.0
      %73 = vadd.xlane.f32.xlu0 %v72
      %v74 = vpop.xlane.xlu0 %73
      %v75 = vsel %vm58, %v71, 0.0
      %76 = vadd.xlane.f32.xlu0 %v75
      %v77 = vpop.xlane.xlu0 %76
      %v78 = vmul.f32 %v74, %v65
      %v79 = vmul.f32 %v77, %v65
      %v80 = vadd.f32 %v78, 1e-05
      %v81 = vadd.f32 %v79, 1e-05
      %v82 = vrsqrt.pop %v80
      %v83 = vrsqrt.pop %v81
      %v84 = vmul.f32 %v68, %v82
      %v85 = vmul.f32 %v69, %v83
      %v86 = vld [vmem:[%s1] sm:$0x1]
      %v88 = vlaneseq
      %v89 = vshrl.u32 %v88, 7
      %v90 = vsub.s32 0, %v89
      %v91 = vrot.slane %v86, %v90
      %v93 = vmul.f32 %v84, %v91
      %v94 = vmul.f32 %v85, %v91
      %v95 = vld [vmem:[%s2] sm:$0x1]
      %v97 = vlaneseq
      %v98 = vshrl.u32 %v97, 7
      %v99 = vsub.s32 0, %v98
      %v100 = vrot.slane %v95, %v99
      %v102 = vadd.f32 %v93, %v100
      %v103 = vadd.f32 %v94, %v100
      %v104 = vpack.c.bf16 %v103, %v102
      %v106 = vunpack.c.l.b16 %v104
      %v107 = vunpack.c.h.b16 %v104
      %v108 = vpack.c.b16 %v106, %v106
      %v109 = vpack.c.b16 %v107, %v107
      %vm112 = vcmask 257024
      %113 = vst.msk [vmem:[#allocation2] sm:$0xf] %vm112, %v108
      %114 = vst.msk [vmem:[#allocation2 + $0x4] sm:$0xf] %vm112, %v109
    $region33: #{tpu_custom_call.1} parent=1 // pred_fallthru
      _
    %v115 = vld [vmem:[#allocation2] sm:$0xf]
    %v116 = vld [vmem:[#allocation2 + $0x4] sm:$0xf]
    %v117 = vld [vmem:[#allocation6] sm:$0xf]
    %v118 = vld [vmem:[#allocation6 + $0x4] sm:$0xf]
    %v119 = vld [vmem:[#allocation6 + $0x8] sm:$0xf]
    %v120 = vld [vmem:[#allocation6 + $0xc] sm:$0xf]
    %v121 = vld [vmem:[%s4] sm:$0x1]
    %v123 = vlaneseq
    %v124 = vshrl.u32 %v123, 7
    %v125 = vsub.s32 0, %v124
    %v126 = vrot.slane %v121, %v125
    %v130 = vunpack.c.l.b16 %v115
    %v131 = vunpack.c.l.b16 %v116
    %v132 = vpack.c.b16 %v131, %v130
    %v137 = vunpack.c.l.b16 %v117
    %v138 = vunpack.c.l.b16 %v118
    %v139 = vunpack.c.l.b16 %v119
    %v140 = vunpack.c.l.b16 %v120
    %v141 = vpack.c.b16 %v138, %v137
    %v142 = vpack.c.b16 %v140, %v139
    %vm145 = vcmask 261120
    %v147 = vsel %vm145, %v132, 0
    %149 = vmatprep.subr.bf16.mxu0 0
    %150 = vmatpush1.bf16.msra.mxu0 0
    %151 = vmatprep.subr.bf16.mxu0 0
    %152 = vmatpush1.bf16.msra.mxu0 0
    %153 = vmatprep.subr.bf16.mxu0 0
    %154 = vmatpush1.bf16.msra.mxu0 0
    %155 = vmatprep.subr.bf16.mxu0 0
    %156 = vmatpush1.bf16.msra.mxu0 0
    %157 = vmatprep.subr.bf16.mxu0 0
    %158 = vmatpush1.bf16.msra.mxu0 0
    %159 = vmatprep.subr.bf16.mxu0 0
    %160 = vmatpush1.bf16.msra.mxu0 0
    %161 = vmatprep.subr.bf16.mxu0 0
    %162 = vmatpush1.bf16.msra.mxu0 %v142
    %163 = vmatprep.subr.bf16.mxu0 0
    %164 = vmatpush1.bf16.msra.mxu0 %v141
    %165 = vmatprep.subr.bf16.mxu0 0
    %166 = vmatpush2.bf16.msra.mxu0 0
    %167 = vmatprep.subr.bf16.mxu0 0
    %168 = vmatpush2.bf16.msra.mxu0 0
    %169 = vmatprep.subr.bf16.mxu0 0
    %170 = vmatpush2.bf16.msra.mxu0 0
    %171 = vmatprep.subr.bf16.mxu0 0
    %172 = vmatpush2.bf16.msra.mxu0 0
    %173 = vmatprep.subr.bf16.mxu0 0
    %174 = vmatpush2.bf16.msra.mxu0 0
    %175 = vmatprep.subr.bf16.mxu0 0
    %176 = vmatpush2.bf16.msra.mxu0 0
    %177 = vmatprep.subr.bf16.mxu0 0
    %178 = vmatpush2.bf16.msra.mxu0 0
    %179 = vmatprep.subr.bf16.mxu0 0
    %180 = vmatpush2.bf16.msra.mxu0 0
    %181 = vmatprep.mubr.bf16.mxu0 0
    %182 = vmatmul.mubr.bf16.gmra.mxu0 %v147
    %v183 = vpop.f32.mrf.mxu0
    %v184 = vadd.f32 %v126, %v183
    %v185 = vpop.f32.mrf.mxu0
    %v186 = vpop.f32.mrf.mxu0
    %v187 = vadd.f32 %v126, %v186
    %v188 = vpop.f32.mrf.mxu0
    %189 = vdwg.mxu0
    %v190 = vpack.c.bf16 %v187, %v184
    %v192 = vunpack.c.l.b16 %v190
    %v193 = vunpack.c.h.b16 %v190
    %v194 = vpack.c.b16 %v192, %v192
    %v195 = vpack.c.b16 %v193, %v193
    %198 = vst [vmem:[#allocation8] sm:$0xf] %v194
    %199 = vst [vmem:[#allocation8 + $0x4] sm:$0xf] %v195
    // Predicated region
    $region34: #{tpu_custom_call.1} parent=1 // pred_check
      _
    $region35: #{tpu_custom_call.1} parent=1 // pred_check_branch
      %201 = sbr.rel (0) target = $region37
    $region36: #{tpu_custom_call.1} parent=1 // pred_region
      %s203 = ssub.s32 128, 128
      %204 = vsyncadd [#allocation5], %s203
      %s205 = sshll.u32 [#allocation8], 4
      %s206 = int_to_ptr.vmem [resolvable:$true] %s205
      %211 = dma.vmem_to_hbm [thread:$0]  %s206, 128, %s5, [#allocation5], 64, 64, 4
    $region37: #{tpu_custom_call.1} parent=1 // pred_fallthru
      _
    // Predicated region
    $region38: #{tpu_custom_call.1} parent=1 // pred_check
      _
    $region39: #{tpu_custom_call.1} parent=1 // pred_check_branch
      %213 = sbr.rel (0) target = $region41
    $region40: #{tpu_custom_call.1} parent=1 // pred_region
      %214 = dma.done [#allocation5], 128
    $region41: #{tpu_custom_call.1} parent=1 // pred_fallthru
      _
    %215 = vsyncpa [#allocation4], 1
    %216 = vsyncpa [#allocation7], 1
    %217 = vsyncpa [#allocation5], 1

</llo_original>
